<compile_context>
chip_gen: v6e
topology: v6e:2x2x1
jax: 0.10.0
libtpu: 0.0.40
codegen_flags: <defaults>
</compile_context>

<pallas_src>
import functools

import jax
import jax.numpy as jnp
from jax.experimental import pallas as pl
from jax.experimental.pallas import tpu as pltpu


def _deit_output_kernel(x_ref, w_ref, b_ref, r_ref, o_ref):
    # x_ref: (TM, K)  bf16 tile of flattened hidden_states
    # w_ref: (K, N)   bf16 weight (constant block index -> fetched once, VMEM resident)
    # b_ref: (1, N)   f32 bias (broadcast over rows)
    # r_ref: (TM, N)  residual (input_tensor) tile, original dtype
    # o_ref: (TM, N)  output tile
    acc = jnp.dot(x_ref[...], w_ref[...], preferred_element_type=jnp.float32)
    acc = acc + b_ref[...].astype(jnp.float32) + r_ref[...].astype(jnp.float32)
    o_ref[...] = acc.astype(o_ref.dtype)


@functools.partial(jax.jit, static_argnames=("tm",))
def deit_output(hidden_states, input_tensor, weight_t, bias, *, tm=512):
    """DeiTOutput forward (inference).

    hidden_states: (B, S, intermediate_size)        -- dense input
    input_tensor:  (B, S, hidden_size)               -- residual
    weight_t:      (intermediate_size, hidden_size)  -- dense weight, already transposed
                                                        (and ideally already bf16)
    bias:          (hidden_size,)
    returns:       (B, S, hidden_size) in input_tensor.dtype
    """
    B, S, K = hidden_states.shape
    N = weight_t.shape[1]
    M = B * S

    # bf16 on the MXU; accumulation stays f32 inside the kernel.
    x = hidden_states.reshape(M, K).astype(jnp.bfloat16)
    w = weight_t.astype(jnp.bfloat16)          # no-op if pre-cast outside the jit
    b = bias.reshape(1, N).astype(jnp.float32)
    r = input_tensor.reshape(M, N)             # keep residual precision as given

    # Tile only over M; keep K and N whole so the weight is resident in VMEM.
    # (tm multiple of 8, or == M -> layout-legal; N/K are full-dim blocks.)
    tm = min(tm, M)
    grid = (pl.cdiv(M, tm),)                   # ragged tail handled by masked final block

    r_isz = jnp.dtype(input_tensor.dtype).itemsize
    o_isz = r_isz

    out = pl.pallas_call(
        _deit_output_kernel,
        out_shape=jax.ShapeDtypeStruct((M, N), input_tensor.dtype),
        grid_spec=pltpu.PrefetchScalarGridSpec(
            num_scalar_prefetch=0,
            grid=grid,
            in_specs=[
                pl.BlockSpec((tm, K), lambda i: (i, 0)),   # activation tile
                pl.BlockSpec((K, N), lambda i: (0, 0)),    # weight: constant -> fetched once
                pl.BlockSpec((1, N), lambda i: (0, 0)),    # bias:   constant -> fetched once
                pl.BlockSpec((tm, N), lambda i: (i, 0)),   # residual tile
            ],
            out_specs=pl.BlockSpec((tm, N), lambda i: (i, 0)),
        ),
        compiler_params=pltpu.CompilerParams(
            # 1-D parallel grid: >=2 steps at real sizes so both v7x TensorCores get work.
            dimension_semantics=("parallel",),
            vmem_limit_bytes=48 * 1024 * 1024,  # ~21 MiB used at tm=512 bf16; headroom on v7x
        ),
        cost_estimate=pl.CostEstimate(
            flops=2 * M * K * N,
            bytes_accessed=(M * K * 2          # x, bf16
                            + K * N * 2        # weight, bf16 (read once)
                            + N * 4            # bias, f32
                            + M * N * r_isz    # residual
                            + M * N * o_isz),  # output
            transcendentals=0,
        ),
    )(x, w, b, r)

    return out.reshape(B, S, N)


if __name__ == "__main__":
    # Small DeiT-style config: batch=2, seq=8, hidden=32, intermediate=4*hidden.
    B, S = 2, 8
    hidden = 32
    intermediate = 4 * hidden  # 128

    key = jax.random.PRNGKey(0)
    k_h, k_r, k_w, k_b = jax.random.split(key, 4)
    hidden_states = jax.random.normal(k_h, (B, S, intermediate), dtype=jnp.float32)
    input_tensor = jax.random.normal(k_r, (B, S, hidden), dtype=jnp.float32)
    weight = jax.random.normal(k_w, (hidden, intermediate), dtype=jnp.float32) * 0.02
    bias = jax.random.normal(k_b, (hidden,), dtype=jnp.float32) * 0.02

    # Parameter prep done ONCE outside the jitted forward: transpose to (K, N) and
    # cast to bf16 (mirrors doing this at weight-load time).
    weight_t = jnp.asarray(weight.T, dtype=jnp.bfloat16)

    # TODO(synk): dropout is omitted (identity at inference); a training-mode variant
    # would use pltpu.prng_seed + pltpu.prng_random_bits to build the mask in-kernel.
    out = deit_output(hidden_states, input_tensor, weight_t, bias)
    out = jax.block_until_ready(out)

    # Reference in f32 (dense + bias + residual). bf16 MXU inputs => loosened tolerance.
    ref = hidden_states @ weight.T + bias + input_tensor

    assert out.shape == (B, S, hidden), out.shape
    assert jnp.allclose(out, ref, atol=2e-2, rtol=2e-2), (
        "mismatch vs reference: max abs err = %g" % float(jnp.max(jnp.abs(out - ref))))
    print("KERNEL_OK")
</pallas_src>

<mosaic_0001>
module attributes {stable_mosaic.version = 11 : i64} {
  func.func @_deit_output_kernel(%arg0: i32, %arg1: memref<16x128xbf16, #tpu.memory_space<vmem>>, %arg2: memref<128x32xbf16, #tpu.memory_space<vmem>>, %arg3: memref<1x32xf32, #tpu.memory_space<vmem>>, %arg4: memref<16x32xf32, #tpu.memory_space<vmem>>, %arg5: memref<16x32xf32, #tpu.memory_space<vmem>>) attributes {dimension_semantics = [#tpu.dimension_semantics<parallel>], iteration_bounds = array<i64: 1>, scalar_prefetch = 0 : i64, scratch_operands = 0 : i64, tpu.core_type = #tpu.core_type<tc>, window_params = [{transform_indices = @transform_0, window_bounds = array<i64: 16, 128>}, {pipeline_mode = #tpu.pipeline_mode<synchronous>, transform_indices = @transform_1, window_bounds = array<i64: 128, 32>}, {pipeline_mode = #tpu.pipeline_mode<synchronous>, transform_indices = @transform_2, window_bounds = array<i64: 1, 32>}, {transform_indices = @transform_3, window_bounds = array<i64: 16, 32>}, {transform_indices = @transform_4, window_bounds = array<i64: 16, 32>}]} {
    %c0 = arith.constant 0 : index
    %c0_0 = arith.constant 0 : index
    %0 = vector.load %arg1[%c0, %c0_0] : memref<16x128xbf16, #tpu.memory_space<vmem>>, vector<16x128xbf16>
    %c0_1 = arith.constant 0 : index
    %c0_2 = arith.constant 0 : index
    %1 = vector.load %arg2[%c0_1, %c0_2] : memref<128x32xbf16, #tpu.memory_space<vmem>>, vector<128x32xbf16>
    %cst = arith.constant dense<0.000000e+00> : vector<16x32xf32>
    %2 = tpu.matmul %0, %1, %cst {dimension_numbers = #tpu.dot_dimension_numbers<[1], [0], [0], [1], [0, 0, 1, 1], [], []>} : vector<16x128xbf16>, vector<128x32xbf16>, vector<16x32xf32> -> vector<16x32xf32>
    %c0_3 = arith.constant 0 : index
    %c0_4 = arith.constant 0 : index
    %3 = vector.load %arg3[%c0_3, %c0_4] : memref<1x32xf32, #tpu.memory_space<vmem>>, vector<1x32xf32>
    %4 = vector.broadcast %3 : vector<1x32xf32> to vector<16x32xf32>
    %5 = arith.addf %2, %4 : vector<16x32xf32>
    %c0_5 = arith.constant 0 : index
    %c0_6 = arith.constant 0 : index
    %6 = vector.load %arg4[%c0_5, %c0_6] : memref<16x32xf32, #tpu.memory_space<vmem>>, vector<16x32xf32>
    %7 = arith.addf %5, %6 : vector<16x32xf32>
    %c0_7 = arith.constant 0 : index
    %c0_8 = arith.constant 0 : index
    %8 = vector.load %arg5[%c0_7, %c0_8] : memref<16x32xf32, #tpu.memory_space<vmem>>, vector<16x32xf32>
    tpu.vector_store %arg5[%c0_7, %c0_8], %7 {strides = array<i32>} : memref<16x32xf32, #tpu.memory_space<vmem>>, vector<16x32xf32>,
    return
  }
  func.func @transform_0(%arg0: i32) -> (i32, i32) {
    %c0_i32 = arith.constant 0 : i32
    %c0_i32_0 = arith.constant 0 : i32
    return %arg0, %c0_i32 : i32, i32
  }
  func.func @transform_1(%arg0: i32) -> (i32, i32) {
    %c0_i32 = arith.constant 0 : i32
    %c0_i32_0 = arith.constant 0 : i32
    %c0_i32_1 = arith.constant 0 : i32
    return %c0_i32, %c0_i32_0 : i32, i32
  }
  func.func @transform_2(%arg0: i32) -> (i32, i32) {
    %c0_i32 = arith.constant 0 : i32
    %c0_i32_0 = arith.constant 0 : i32
    %c0_i32_1 = arith.constant 0 : i32
    return %c0_i32, %c0_i32_0 : i32, i32
  }
  func.func @transform_3(%arg0: i32) -> (i32, i32) {
    %c0_i32 = arith.constant 0 : i32
    %c0_i32_0 = arith.constant 0 : i32
    return %arg0, %c0_i32 : i32, i32
  }
  func.func @transform_4(%arg0: i32) -> (i32, i32) {
    %c0_i32 = arith.constant 0 : i32
    %c0_i32_0 = arith.constant 0 : i32
    return %arg0, %c0_i32 : i32, i32
  }
}

</mosaic_0001>

<llo_original>
// kernel: deit_output.1
$region0: #{deit_output.1}
  #allocation0 [shape = 'u32[]', space=smem, size = 0x4, offset = 0x4, fixed_abs, tag = 'smem constant byte address 0x4 - core index']
  #allocation1 [shape = 'u32[144,128]{1,0:T(1,128)}', space=vmem, size = 0x12000, scoped, tag = 'internal scratch']
  %s0 = inlined_call_operand.vmem [shape: bf16[16,128], index: 0, kind: input, shape index: {}]
  %s1 = inlined_call_operand.vmem [shape: bf16[128,32], index: 1, kind: input, shape index: {}]
  %s2 = inlined_call_operand.vmem [shape: f32[1,32], index: 2, kind: input, shape index: {}]
  %s3 = inlined_call_operand.vmem [shape: f32[16,32], index: 3, kind: input, shape index: {}]
  %s4 = inlined_call_operand.hbm [shape: f32[16,32], index: 4, kind: output, shape index: {}]
  %s5 = sld [smem:[#allocation0]]
  $region26: #{deit_output.1} parent=0
    _
  %s7 = ssub.s32 1, %s5
  %s8 = scalar_select 0, %s7, %s5
  $region1: #{deit_output.1} parent=0
    #allocation2 [shape = 'u8[8192]{0}', space=vmem, size = 0x2000, scoped, tag = 'output window, operand 0, single buffered']
    #allocation3 [shape = 's32[1]{0}', space=sflag, size = 0x4, scoped, tag = 'scoped memory for deit_output.1']
    %9 = vsyncpa [#allocation3], 0
    // Predicated region
    $region2: #{deit_output.1} parent=1 // pred_check
      _
    $region3: #{deit_output.1} parent=1 // pred_check_branch
      %11 = sbr.rel (0) target = $region5
    $region4: #{deit_output.1} parent=1 // pred_region
      _
    $region5: #{deit_output.1} parent=1 // pred_fallthru
      _
    // Predicated region
    $region6: #{deit_output.1} parent=1 // pred_check
      _
    $region7: #{deit_output.1} parent=1 // pred_check_branch
      %13 = sbr.rel (0) target = $region9
    $region8: #{deit_output.1} parent=1 // pred_region
      _
    $region9: #{deit_output.1} parent=1 // pred_fallthru
      _
    // Predicated region
    $region10: #{deit_output.1} parent=1 // pred_check
      _
    $region11: #{deit_output.1} parent=1 // pred_check_branch
      %15 = sbr.rel (0) target = $region13
    $region12: #{deit_output.1} parent=1 // pred_region
      _
    $region13: #{deit_output.1} parent=1 // pred_fallthru
      _
    // Predicated region
    $region14: #{deit_output.1} parent=1 // pred_check
      _
    $region15: #{deit_output.1} parent=1 // pred_check_branch
      %17 = sbr.rel (0) target = $region17
    $region16: #{deit_output.1} parent=1 // pred_region
      _
    $region17: #{deit_output.1} parent=1 // pred_fallthru
      _
    %v19 = vld [vmem:[%s0] sm:$0xf]
    %v20 = vld [vmem:[%s0 + $0x4] sm:$0xf]
    %v21 = vld [vmem:[%s1] sm:$0xf]
    %v22 = vld [vmem:[%s1 + $0x4] sm:$0xf]
    %v23 = vld [vmem:[%s1 + $0x8] sm:$0xf]
    %v24 = vld [vmem:[%s1 + $0xc] sm:$0xf]
    %v25 = vld [vmem:[%s1 + $0x10] sm:$0xf]
    %v26 = vld [vmem:[%s1 + $0x14] sm:$0xf]
    %v27 = vld [vmem:[%s1 + $0x18] sm:$0xf]
    %v28 = vld [vmem:[%s1 + $0x1c] sm:$0xf]
    %v29 = vld [vmem:[%s1 + $0x20] sm:$0xf]
    %v30 = vld [vmem:[%s1 + $0x24] sm:$0xf]
    %v31 = vld [vmem:[%s1 + $0x28] sm:$0xf]
    %v32 = vld [vmem:[%s1 + $0x2c] sm:$0xf]
    %v33 = vld [vmem:[%s1 + $0x30] sm:$0xf]
    %v34 = vld [vmem:[%s1 + $0x34] sm:$0xf]
    %v35 = vld [vmem:[%s1 + $0x38] sm:$0xf]
    %v36 = vld [vmem:[%s1 + $0x3c] sm:$0xf]
    %v37 = vld [vmem:[%s2] sm:$0x1]
    %v39 = vlaneseq
    %v40 = vshrl.u32 %v39, 7
    %v41 = vsub.s32 0, %v40
    %v42 = vrot.slane %v37, %v41
    %v46 = vunpack.c.l.b16 %v19
    %v47 = vunpack.c.l.b16 %v20
    %v48 = vpack.c.b16 %v47, %v46
    %v66 = vunpack.c.l.b16 %v21
    %v67 = vunpack.c.l.b16 %v22
    %v68 = vunpack.c.l.b16 %v23
    %v69 = vunpack.c.l.b16 %v24
    %v70 = vunpack.c.l.b16 %v25
    %v71 = vunpack.c.l.b16 %v26
    %v72 = vunpack.c.l.b16 %v27
    %v73 = vunpack.c.l.b16 %v28
    %v74 = vunpack.c.l.b16 %v29
    %v75 = vunpack.c.l.b16 %v30
    %v76 = vunpack.c.l.b16 %v31
    %v77 = vunpack.c.l.b16 %v32
    %v78 = vunpack.c.l.b16 %v33
    %v79 = vunpack.c.l.b16 %v34
    %v80 = vunpack.c.l.b16 %v35
    %v81 = vunpack.c.l.b16 %v36
    %v82 = vpack.c.b16 %v67, %v66
    %v83 = vpack.c.b16 %v69, %v68
    %v84 = vpack.c.b16 %v71, %v70
    %v85 = vpack.c.b16 %v73, %v72
    %v86 = vpack.c.b16 %v75, %v74
    %v87 = vpack.c.b16 %v77, %v76
    %v88 = vpack.c.b16 %v79, %v78
    %v89 = vpack.c.b16 %v81, %v80
    %98 = vmatprep.subr.bf16.mxu0 0
    %99 = vmatpush1.bf16.msra.mxu0 %v89
    %100 = vmatprep.subr.bf16.mxu0 0
    %101 = vmatpush1.bf16.msra.mxu0 %v88
    %102 = vmatprep.subr.bf16.mxu0 0
    %103 = vmatpush1.bf16.msra.mxu0 %v87
    %104 = vmatprep.subr.bf16.mxu0 0
    %105 = vmatpush1.bf16.msra.mxu0 %v86
    %106 = vmatprep.subr.bf16.mxu0 0
    %107 = vmatpush1.bf16.msra.mxu0 %v85
    %108 = vmatprep.subr.bf16.mxu0 0
    %109 = vmatpush1.bf16.msra.mxu0 %v84
    %110 = vmatprep.subr.bf16.mxu0 0
    %111 = vmatpush1.bf16.msra.mxu0 %v83
    %112 = vmatprep.subr.bf16.mxu0 0
    %113 = vmatpush1.bf16.msra.mxu0 %v82
    %114 = vmatprep.subr.bf16.mxu0 0
    %115 = vmatpush2.bf16.msra.mxu0 0
    %116 = vmatprep.subr.bf16.mxu0 0
    %117 = vmatpush2.bf16.msra.mxu0 0
    %118 = vmatprep.subr.bf16.mxu0 0
    %119 = vmatpush2.bf16.msra.mxu0 0
    %120 = vmatprep.subr.bf16.mxu0 0
    %121 = vmatpush2.bf16.msra.mxu0 0
    %122 = vmatprep.subr.bf16.mxu0 0
    %123 = vmatpush2.bf16.msra.mxu0 0
    %124 = vmatprep.subr.bf16.mxu0 0
    %125 = vmatpush2.bf16.msra.mxu0 0
    %126 = vmatprep.subr.bf16.mxu0 0
    %127 = vmatpush2.bf16.msra.mxu0 0
    %128 = vmatprep.subr.bf16.mxu0 0
    %129 = vmatpush2.bf16.msra.mxu0 0
    %130 = vmatprep.mubr.bf16.mxu0 0
    %131 = vmatmul.mubr.bf16.gmra.mxu0 %v48
    %v132 = vpop.f32.mrf.mxu0
    %v133 = vadd.f32 %v42, %v132
    %v134 = vpop.f32.mrf.mxu0
    %v135 = vpop.f32.mrf.mxu0
    %v136 = vadd.f32 %v42, %v135
    %v137 = vpop.f32.mrf.mxu0
    %138 = vdwg.mxu0
    %v139 = vld [vmem:[%s3] sm:$0xff]
    %v140 = vld [vmem:[%s3 + $0x8] sm:$0xff]
    %v141 = vadd.f32 %v133, %v139
    %v142 = vadd.f32 %v136, %v140
    %vm143 = vcmask 261120
    %144 = vst.msk [vmem:[#allocation2] sm:$0xff] %vm143, %v141
    %145 = vst.msk [vmem:[#allocation2 + $0x8] sm:$0xff] %vm143, %v142
    // Predicated region
    $region18: #{deit_output.1} parent=1 // pred_check
      _
    $region19: #{deit_output.1} parent=1 // pred_check_branch
      %147 = sbr.rel (0) target = $region21
    $region20: #{deit_output.1} parent=1 // pred_region
      %s149 = ssub.s32 256, 256
      %150 = vsyncadd [#allocation3], %s149
      %s151 = sshll.u32 [#allocation2], 4
      %s152 = int_to_ptr.vmem [resolvable:$true] %s151
      %157 = dma.vmem_to_hbm [thread:$0]  %s152, 256, %s4, [#allocation3], 128, 128, 8
    $region21: #{deit_output.1} parent=1 // pred_fallthru
      _
    // Predicated region
    $region22: #{deit_output.1} parent=1 // pred_check
      _
    $region23: #{deit_output.1} parent=1 // pred_check_branch
      %159 = sbr.rel (0) target = $region25
    $region24: #{deit_output.1} parent=1 // pred_region
      %160 = dma.done [#allocation3], 256
    $region25: #{deit_output.1} parent=1 // pred_fallthru
      _
    %161 = vsyncpa [#allocation3], 1

</llo_original>
